<compile_context>
chip_gen: v7x
topology: tpu7x:2x2x1
jax: 0.10.0
libtpu: 0.0.40
codegen_flags: <defaults>
</compile_context>

<pallas_src>
import jax
import jax.numpy as jnp
from jax import lax
from jax.experimental import pallas as pl
from jax.experimental.pallas import tpu as pltpu


def make_double_conv_kernel(Bk, HW, Cout, eps=1e-5):
    """One grid step processes a chunk of Bk samples.

    Refs:
      p_ref   : (Bk*HW, Kp)    bf16  im2col patches (+ ones column, zero-padded K)
      w_ref   : (Kp, 2*Cout)   bf16  [conv1 | conv2] fused weight (+ bias row)
      td_ref  : (Bk, Cout)     f32   relu(dense(t)) per sample (precomputed)
      lnw_ref : (HW, Cout)     f32   LayerNorm weight, HWC layout
      lnb_ref : (HW, Cout)     f32   LayerNorm bias, HWC layout
      o_ref   : (Bk, HW, Cout) f32   output
    """
    inv_n = 1.0 / float(HW * Cout)

    def kernel(p_ref, w_ref, td_ref, lnw_ref, lnb_ref, o_ref):
        # One well-shaped MXU matmul covering both convs and both biases
        # (bias folded through the ones column of the padded patch matrix).
        acc = jnp.dot(p_ref[...], w_ref[...],
                      preferred_element_type=jnp.float32)         # (Bk*HW, 2*Cout)

        c1 = jnp.maximum(acc[:, :Cout], 0.0).reshape(Bk, HW, Cout)  # relu(conv1+b1)
        c2 = acc[:, Cout:].reshape(Bk, HW, Cout)                    # conv2+b2

        td = td_ref[...].reshape(Bk, 1, Cout)                       # bcast over HW
        out = c2 + c1 * td                                          # (Bk, HW, Cout)

        # Per-sample LayerNorm over (C, H, W): one-pass stats (E[x^2] - mean^2).
        s1 = jnp.sum(jnp.sum(out, axis=2, keepdims=True), axis=1, keepdims=True)
        s2 = jnp.sum(jnp.sum(out * out, axis=2, keepdims=True), axis=1,
                     keepdims=True)
        mean = s1 * inv_n
        var = s2 * inv_n - mean * mean
        inv = lax.rsqrt(var + eps)                                  # EUP
        normed = (out - mean) * inv * lnw_ref[...] + lnb_ref[...]
        o_ref[...] = jnp.maximum(normed, 0.0)

    return kernel


def double_conv_forward(img, t, params, *, batch_block=None, eps=1e-5):
    """img: (B, Cin, H, W) NCHW, t: (B, 192). Returns (B, 128, H, W) NCHW."""
    B, Cin, H, W = img.shape
    Cout = 128
    HW = H * W
    if batch_block is None:
        batch_block = B            # whole batch fits in one grid step at these sizes
    assert B % batch_block == 0
    nb = B // batch_block

    # ---- wrapper-side im2col (lane-dense repack; negligible cost at these shapes) ----
    x = jnp.transpose(img, (0, 2, 3, 1)).astype(jnp.float32)        # NHWC
    xp = jnp.pad(x, ((0, 0), (1, 1), (1, 1), (0, 0)))               # padding=1
    taps = [xp[:, kh:kh + H, kw:kw + W, :] for kh in range(3) for kw in range(3)]
    patches = jnp.stack(taps, axis=3).reshape(B * HW, 9 * Cin)      # (B*HW, 9*Cin)

    K = 9 * Cin
    Kp = ((K + 1 + 127) // 128) * 128            # lane-dense K, room for bias column
    # columns: [patches (K) | ones (1, bias lane) | zeros (Kp-K-1)]
    patches = jnp.concatenate(
        [patches,
         jnp.ones((B * HW, 1), jnp.float32),
         jnp.zeros((B * HW, Kp - K - 1), jnp.float32)], axis=1).astype(jnp.bfloat16)

    def conv_w(w):  # (Cout, Cin, 3, 3) OIHW -> (9*Cin, Cout), rows ordered (kh, kw, ci)
        return jnp.transpose(w, (2, 3, 1, 0)).reshape(K, Cout)

    wfused = jnp.concatenate([conv_w(params["w1"]), conv_w(params["w2"])], axis=1)
    b12 = jnp.concatenate([params["b1"], params["b2"]]).reshape(1, 2 * Cout)
    wfused = jnp.concatenate(
        [wfused, b12, jnp.zeros((Kp - K - 1, 2 * Cout), jnp.float32)],
        axis=0).astype(jnp.bfloat16)                                  # (Kp, 2*Cout)

    # ---- time-embedding dense hoisted out of the kernel (one XLA matmul, f32) ----
    td = jnp.maximum(t.astype(jnp.float32) @ params["wd"] + params["bd"], 0.0)  # (B, Cout)

    # LayerNorm affine params: (Cout, H, W) -> (H*W, Cout) to match kernel layout
    lnw = jnp.transpose(params["ln_w"], (1, 2, 0)).reshape(HW, Cout)
    lnb = jnp.transpose(params["ln_b"], (1, 2, 0)).reshape(HW, Cout)

    def full(arr):  # whole-array block, same tile every grid step
        nd = arr.ndim
        return pl.BlockSpec(arr.shape, lambda i, _nd=nd: (0,) * _nd)

    Mk = batch_block * HW
    out = pl.pallas_call(
        make_double_conv_kernel(batch_block, HW, Cout, eps),
        out_shape=jax.ShapeDtypeStruct((B, HW, Cout), jnp.float32),
        grid=(nb,),
        in_specs=[
            pl.BlockSpec((Mk, Kp), lambda i: (i, 0)),              # patches, per chunk
            full(wfused),
            pl.BlockSpec((batch_block, Cout), lambda i: (i, 0)),   # td, per chunk
            full(lnw), full(lnb),
        ],
        out_specs=pl.BlockSpec((batch_block, HW, Cout), lambda i: (i, 0, 0)),
        compiler_params=pltpu.CompilerParams(
            dimension_semantics=("parallel",)),   # shard batch chunks across TCs (v7x)
    )(patches, wfused, td, lnw, lnb)

    return out.reshape(B, H, W, Cout).transpose(0, 3, 1, 2)


def ref_forward(img, t, params, eps=1e-5):
    """Pure-JAX (f32) reference matching the PyTorch forward (NCHW)."""
    dn = ("NCHW", "OIHW", "NCHW")
    c1 = lax.conv_general_dilated(img, params["w1"], (1, 1), "SAME",
                                  dimension_numbers=dn)
    c1 = jnp.maximum(c1 + params["b1"][None, :, None, None], 0.0)
    td = jnp.maximum(t @ params["wd"] + params["bd"], 0.0).reshape(-1, 128, 1, 1)
    x_param = c1 * td
    c2 = lax.conv_general_dilated(img, params["w2"], (1, 1), "SAME",
                                  dimension_numbers=dn)
    out = c2 + params["b2"][None, :, None, None] + x_param
    mean = out.mean(axis=(1, 2, 3), keepdims=True)
    var = ((out - mean) ** 2).mean(axis=(1, 2, 3), keepdims=True)
    normed = (out - mean) / jnp.sqrt(var + eps)
    normed = normed * params["ln_w"][None] + params["ln_b"][None]
    return jnp.maximum(normed, 0.0)


if __name__ == "__main__":
    # Small shapes consistent with the module: DoubleConv(in_channels=8, size=8)
    B, Cin, H, W = 2, 8, 8, 8
    Cout = 128

    key = jax.random.PRNGKey(0)
    ks = jax.random.split(key, 10)
    params = {
        "w1": 0.1 * jax.random.normal(ks[0], (Cout, Cin, 3, 3), jnp.float32),
        "b1": 0.1 * jax.random.normal(ks[1], (Cout,), jnp.float32),
        "w2": 0.1 * jax.random.normal(ks[2], (Cout, Cin, 3, 3), jnp.float32),
        "b2": 0.1 * jax.random.normal(ks[3], (Cout,), jnp.float32),
        # Linear(192, 128): stored pre-transposed as (in, out)
        "wd": 0.1 * jax.random.normal(ks[4], (192, Cout), jnp.float32),
        "bd": 0.1 * jax.random.normal(ks[5], (Cout,), jnp.float32),
        # LayerNorm([128, H, W]) affine params
        "ln_w": jnp.ones((Cout, H, W), jnp.float32)
                + 0.1 * jax.random.normal(ks[6], (Cout, H, W), jnp.float32),
        "ln_b": 0.1 * jax.random.normal(ks[7], (Cout, H, W), jnp.float32),
    }

    img = jax.random.normal(ks[8], (B, Cin, H, W), jnp.float32)
    t = jax.random.normal(ks[9], (B, 192), jnp.float32)

    out = jax.block_until_ready(double_conv_forward(img, t, params))
    assert out.shape == (B, Cout, H, W), out.shape

    ref = ref_forward(img, t, params)
    # Tolerance sized for bf16 MXU operands (f32 accumulation); f32 reference.
    if not jnp.allclose(out, ref, atol=5e-2, rtol=5e-2):
        raise AssertionError(
            f"mismatch vs reference: max abs diff = {float(jnp.max(jnp.abs(out - ref)))}")

    print("KERNEL_OK")
</pallas_src>

<mosaic_0001>
module attributes {stable_mosaic.version = 11 : i64} {
  func.func @kernel(%arg0: i32, %arg1: memref<128x128xbf16, #tpu.memory_space<vmem>>, %arg2: memref<128x256xbf16, #tpu.memory_space<vmem>>, %arg3: memref<2x128xf32, #tpu.memory_space<vmem>>, %arg4: memref<64x128xf32, #tpu.memory_space<vmem>>, %arg5: memref<64x128xf32, #tpu.memory_space<vmem>>, %arg6: memref<2x64x128xf32, #tpu.memory_space<vmem>>) attributes {dimension_semantics = [#tpu.dimension_semantics<parallel>], iteration_bounds = array<i64: 1>, scalar_prefetch = 0 : i64, scratch_operands = 0 : i64, tpu.core_type = #tpu.core_type<tc>, window_params = [{transform_indices = @transform_0, window_bounds = array<i64: 128, 128>}, {pipeline_mode = #tpu.pipeline_mode<synchronous>, transform_indices = @transform_1, window_bounds = array<i64: 128, 256>}, {transform_indices = @transform_2, window_bounds = array<i64: 2, 128>}, {pipeline_mode = #tpu.pipeline_mode<synchronous>, transform_indices = @transform_3, window_bounds = array<i64: 64, 128>}, {pipeline_mode = #tpu.pipeline_mode<synchronous>, transform_indices = @transform_4, window_bounds = array<i64: 64, 128>}, {transform_indices = @transform_5, window_bounds = array<i64: 2, 64, 128>}]} {
    %c0 = arith.constant 0 : index
    %c0_0 = arith.constant 0 : index
    %0 = vector.load %arg1[%c0, %c0_0] : memref<128x128xbf16, #tpu.memory_space<vmem>>, vector<128x128xbf16>
    %c0_1 = arith.constant 0 : index
    %c0_2 = arith.constant 0 : index
    %1 = vector.load %arg2[%c0_1, %c0_2] : memref<128x256xbf16, #tpu.memory_space<vmem>>, vector<128x256xbf16>
    %cst = arith.constant dense<0.000000e+00> : vector<128x256xf32>
    %2 = tpu.matmul %0, %1, %cst {dimension_numbers = #tpu.dot_dimension_numbers<[1], [0], [0], [1], [0, 0, 1, 1], [], []>} : vector<128x128xbf16>, vector<128x256xbf16>, vector<128x256xf32> -> vector<128x256xf32>
    %3 = vector.extract_strided_slice %2 {offsets = [0, 0], sizes = [128, 128], strides = [1, 1]} : vector<128x256xf32> to vector<128x128xf32>
    %cst_3 = arith.constant 0.000000e+00 : f32
    %4 = vector.broadcast %cst_3 : f32 to vector<128x128xf32>
    %5 = arith.maximumf %3, %4 : vector<128x128xf32>
    %6 = vector.shape_cast %5 : vector<128x128xf32> to vector<2x64x128xf32>
    %7 = vector.extract_strided_slice %2 {offsets = [0, 128], sizes = [128, 128], strides = [1, 1]} : vector<128x256xf32> to vector<128x128xf32>
    %8 = vector.shape_cast %7 : vector<128x128xf32> to vector<2x64x128xf32>
    %c0_4 = arith.constant 0 : index
    %c0_5 = arith.constant 0 : index
    %9 = vector.load %arg3[%c0_4, %c0_5] : memref<2x128xf32, #tpu.memory_space<vmem>>, vector<2x128xf32>
    %10 = vector.shape_cast %9 : vector<2x128xf32> to vector<2x1x128xf32>
    %11 = vector.broadcast %10 : vector<2x1x128xf32> to vector<2x64x128xf32>
    %12 = arith.mulf %6, %11 : vector<2x64x128xf32>
    %13 = arith.addf %8, %12 : vector<2x64x128xf32>
    %cst_6 = arith.constant dense<0.000000e+00> : vector<2x64xf32>
    %14 = vector.multi_reduction <add>, %13, %cst_6 [2] : vector<2x64x128xf32> to vector<2x64xf32>
    %15 = vector.shape_cast %14 : vector<2x64xf32> to vector<2x64x1xf32>
    %cst_7 = arith.constant dense<0.000000e+00> : vector<2x1xf32>
    %16 = vector.multi_reduction <add>, %15, %cst_7 [1] : vector<2x64x1xf32> to vector<2x1xf32>
    %17 = vector.shape_cast %16 : vector<2x1xf32> to vector<2x1x1xf32>
    %18 = arith.mulf %13, %13 : vector<2x64x128xf32>
    %cst_8 = arith.constant dense<0.000000e+00> : vector<2x64xf32>
    %19 = vector.multi_reduction <add>, %18, %cst_8 [2] : vector<2x64x128xf32> to vector<2x64xf32>
    %20 = vector.shape_cast %19 : vector<2x64xf32> to vector<2x64x1xf32>
    %cst_9 = arith.constant dense<0.000000e+00> : vector<2x1xf32>
    %21 = vector.multi_reduction <add>, %20, %cst_9 [1] : vector<2x64x1xf32> to vector<2x1xf32>
    %22 = vector.shape_cast %21 : vector<2x1xf32> to vector<2x1x1xf32>
    %cst_10 = arith.constant 1.22070313E-4 : f32
    %23 = vector.broadcast %cst_10 : f32 to vector<2x1x1xf32>
    %24 = arith.mulf %17, %23 : vector<2x1x1xf32>
    %cst_11 = arith.constant 1.22070313E-4 : f32
    %25 = vector.broadcast %cst_11 : f32 to vector<2x1x1xf32>
    %26 = arith.mulf %22, %25 : vector<2x1x1xf32>
    %27 = arith.mulf %24, %24 : vector<2x1x1xf32>
    %28 = arith.subf %26, %27 : vector<2x1x1xf32>
    %cst_12 = arith.constant 9.99999974E-6 : f32
    %29 = vector.broadcast %cst_12 : f32 to vector<2x1x1xf32>
    %30 = arith.addf %28, %29 : vector<2x1x1xf32>
    %31 = math.rsqrt %30 : vector<2x1x1xf32>
    %32 = vector.broadcast %24 : vector<2x1x1xf32> to vector<2x64x128xf32>
    %33 = arith.subf %13, %32 : vector<2x64x128xf32>
    %34 = vector.broadcast %31 : vector<2x1x1xf32> to vector<2x64x128xf32>
    %35 = arith.mulf %33, %34 : vector<2x64x128xf32>
    %c0_13 = arith.constant 0 : index
    %c0_14 = arith.constant 0 : index
    %36 = vector.load %arg4[%c0_13, %c0_14] : memref<64x128xf32, #tpu.memory_space<vmem>>, vector<64x128xf32>
    %37 = vector.shape_cast %36 : vector<64x128xf32> to vector<1x64x128xf32>
    %38 = vector.broadcast %37 : vector<1x64x128xf32> to vector<2x64x128xf32>
    %39 = arith.mulf %35, %38 : vector<2x64x128xf32>
    %c0_15 = arith.constant 0 : index
    %c0_16 = arith.constant 0 : index
    %40 = vector.load %arg5[%c0_15, %c0_16] : memref<64x128xf32, #tpu.memory_space<vmem>>, vector<64x128xf32>
    %41 = vector.shape_cast %40 : vector<64x128xf32> to vector<1x64x128xf32>
    %42 = vector.broadcast %41 : vector<1x64x128xf32> to vector<2x64x128xf32>
    %43 = arith.addf %39, %42 : vector<2x64x128xf32>
    %cst_17 = arith.constant 0.000000e+00 : f32
    %44 = vector.broadcast %cst_17 : f32 to vector<2x64x128xf32>
    %45 = arith.maximumf %43, %44 : vector<2x64x128xf32>
    %c0_18 = arith.constant 0 : index
    %c0_19 = arith.constant 0 : index
    %c0_20 = arith.constant 0 : index
    %46 = vector.load %arg6[%c0_18, %c0_19, %c0_20] : memref<2x64x128xf32, #tpu.memory_space<vmem>>, vector<2x64x128xf32>
    tpu.vector_store %arg6[%c0_18, %c0_19, %c0_20], %45 {strides = array<i32>} : memref<2x64x128xf32, #tpu.memory_space<vmem>>, vector<2x64x128xf32>,
    return
  }
  func.func @transform_0(%arg0: i32) -> (i32, i32) {
    %c0_i32 = arith.constant 0 : i32
    %c0_i32_0 = arith.constant 0 : i32
    return %arg0, %c0_i32 : i32, i32
  }
  func.func @transform_1(%arg0: i32) -> (i32, i32) {
    %c0_i32 = arith.constant 0 : i32
    %c0_i32_0 = arith.constant 0 : i32
    %c0_i32_1 = arith.constant 0 : i32
    return %c0_i32, %c0_i32_0 : i32, i32
  }
  func.func @transform_2(%arg0: i32) -> (i32, i32) {
    %c0_i32 = arith.constant 0 : i32
    %c0_i32_0 = arith.constant 0 : i32
    return %arg0, %c0_i32 : i32, i32
  }
  func.func @transform_3(%arg0: i32) -> (i32, i32) {
    %c0_i32 = arith.constant 0 : i32
    %c0_i32_0 = arith.constant 0 : i32
    %c0_i32_1 = arith.constant 0 : i32
    return %c0_i32, %c0_i32_0 : i32, i32
  }
  func.func @transform_4(%arg0: i32) -> (i32, i32) {
    %c0_i32 = arith.constant 0 : i32
    %c0_i32_0 = arith.constant 0 : i32
    %c0_i32_1 = arith.constant 0 : i32
    return %c0_i32, %c0_i32_0 : i32, i32
  }
  func.func @transform_5(%arg0: i32) -> (i32, i32, i32) {
    %c0_i32 = arith.constant 0 : i32
    %c0_i32_0 = arith.constant 0 : i32
    %c0_i32_1 = arith.constant 0 : i32
    return %arg0, %c0_i32, %c0_i32_0 : i32, i32, i32
  }
}

</mosaic_0001>

<llo_original>
// kernel: tpu_custom_call.1
$region0: #{tpu_custom_call.1}
  #allocation0 [shape = 'u32[]', space=smem, size = 0x4, offset = 0x4, fixed_abs, tag = 'smem constant byte address 0x4 - core index']
  #allocation1 [shape = 'u32[144,128]{1,0:T(1,128)}', space=vmem, size = 0x12000, scoped, tag = 'internal scratch']
  %s0 = inlined_call_operand.hbm [shape: bf16[128,128], index: 0, kind: input, shape index: {}]
  %s1 = inlined_call_operand.hbm [shape: bf16[128,256], index: 1, kind: input, shape index: {}]
  %s2 = inlined_call_operand.vmem [shape: f32[2,128], index: 2, kind: input, shape index: {}]
  %s3 = inlined_call_operand.hbm [shape: f32[64,128], index: 3, kind: input, shape index: {}]
  %s4 = inlined_call_operand.hbm [shape: f32[64,128], index: 4, kind: input, shape index: {}]
  %s5 = inlined_call_operand.hbm [shape: f32[2,64,128], index: 5, kind: output, shape index: {}]
  %s6 = sld [smem:[#allocation0]]
  $region46: #{tpu_custom_call.1} parent=0
    _
  %s8 = ssub.s32 1, %s6
  %s9 = scalar_select 0, %s8, %s6
  $region1: #{tpu_custom_call.1} parent=0
    #allocation2 [shape = 'u8[32768]{0}', space=vmem, size = 0x8000, scoped, tag = 'input window, operand 0, single buffered']
    #allocation3 [shape = 's32[1]{0}', space=sflag, size = 0x4, scoped, tag = 'scoped memory for tpu_custom_call.1']
    #allocation4 [shape = 's32[1]{0}', space=sflag, size = 0x4, scoped, tag = 'scoped memory for tpu_custom_call.1']
    #allocation5 [shape = 'u8[65536]{0}', space=vmem, size = 0x10000, scoped, tag = 'input window, operand 1, single buffered']
    #allocation6 [shape = 's32[1]{0}', space=sflag, size = 0x4, scoped, tag = 'scoped memory for tpu_custom_call.1']
    #allocation7 [shape = 'u8[32768]{0}', space=vmem, size = 0x8000, scoped, tag = 'input window, operand 3, single buffered']
    #allocation8 [shape = 'u8[32768]{0}', space=vmem, size = 0x8000, scoped, tag = 'input window, operand 4, single buffered']
    #allocation9 [shape = 's32[1]{0}', space=sflag, size = 0x4, scoped, tag = 'scoped memory for tpu_custom_call.1']
    #allocation10 [shape = 'u8[65536]{0}', space=vmem, size = 0x10000, scoped, tag = 'output window, operand 0, single buffered']
    %10 = vsyncpa [#allocation3], 0
    %11 = vsyncpa [#allocation6], 0
    %12 = vsyncpa [#allocation9], 0
    %13 = vsyncpa [#allocation4], 0
    // Predicated region
    $region2: #{tpu_custom_call.1} parent=1 // pred_check
      _
    $region3: #{tpu_custom_call.1} parent=1 // pred_check_branch
      %15 = sbr.rel (0) target = $region5
    $region4: #{tpu_custom_call.1} parent=1 // pred_region
      %s17 = ssub.s32 1024, 1024
      %18 = vsyncadd [#allocation3], %s17
      %s19 = sshll.u32 [#allocation2], 4
      %s20 = int_to_ptr.vmem [resolvable:$true] %s19
      %25 = dma.hbm_to_vmem [thread:$0]  %s0, 1024, %s20, [#allocation3], 64, 64, 4
    $region5: #{tpu_custom_call.1} parent=1 // pred_fallthru
      _
    // Predicated region
    $region6: #{tpu_custom_call.1} parent=1 // pred_check
      _
    $region7: #{tpu_custom_call.1} parent=1 // pred_check_branch
      %27 = sbr.rel (0) target = $region9
    $region8: #{tpu_custom_call.1} parent=1 // pred_region
      %s29 = ssub.s32 2048, 2048
      %30 = vsyncadd [#allocation6], %s29
      %s31 = sshll.u32 [#allocation5], 4
      %s32 = int_to_ptr.vmem [resolvable:$true] %s31
      %37 = dma.hbm_to_vmem [thread:$0]  %s1, 2048, %s32, [#allocation6], 128, 128, 8
    $region9: #{tpu_custom_call.1} parent=1 // pred_fallthru
      _
    // Predicated region
    $region10: #{tpu_custom_call.1} parent=1 // pred_check
      _
    $region11: #{tpu_custom_call.1} parent=1 // pred_check_branch
      %39 = sbr.rel (0) target = $region13
    $region12: #{tpu_custom_call.1} parent=1 // pred_region
      _
    $region13: #{tpu_custom_call.1} parent=1 // pred_fallthru
      _
    // Predicated region
    $region14: #{tpu_custom_call.1} parent=1 // pred_check
      _
    $region15: #{tpu_custom_call.1} parent=1 // pred_check_branch
      %41 = sbr.rel (0) target = $region17
    $region16: #{tpu_custom_call.1} parent=1 // pred_region
      %s43 = ssub.s32 1024, 1024
      %44 = vsyncadd [#allocation6], %s43
      %s45 = sshll.u32 [#allocation7], 4
      %s46 = int_to_ptr.vmem [resolvable:$true] %s45
      %51 = dma.hbm_to_vmem [thread:$0]  %s3, 1024, %s46, [#allocation6], 128, 128, 8
    $region17: #{tpu_custom_call.1} parent=1 // pred_fallthru
      _
    // Predicated region
    $region18: #{tpu_custom_call.1} parent=1 // pred_check
      _
    $region19: #{tpu_custom_call.1} parent=1 // pred_check_branch
      %53 = sbr.rel (0) target = $region21
    $region20: #{tpu_custom_call.1} parent=1 // pred_region
      %s55 = ssub.s32 1024, 1024
      %56 = vsyncadd [#allocation9], %s55
      %s57 = sshll.u32 [#allocation8], 4
      %s58 = int_to_ptr.vmem [resolvable:$true] %s57
      %63 = dma.hbm_to_vmem [thread:$0]  %s4, 1024, %s58, [#allocation9], 128, 128, 8
    $region21: #{tpu_custom_call.1} parent=1 // pred_fallthru
      _
    // Predicated region
    $region22: #{tpu_custom_call.1} parent=1 // pred_check
      _
    $region23: #{tpu_custom_call.1} parent=1 // pred_check_branch
      %65 = sbr.rel (0) target = $region25
    $region24: #{tpu_custom_call.1} parent=1 // pred_region
      %66 = dma.done [#allocation3], 1024
    $region25: #{tpu_custom_call.1} parent=1 // pred_fallthru
      _
    // Predicated region
    $region26: #{tpu_custom_call.1} parent=1 // pred_check
      _
    $region27: #{tpu_custom_call.1} parent=1 // pred_check_branch
      %68 = sbr.rel (0) target = $region29
    $region28: #{tpu_custom_call.1} parent=1 // pred_region
      %69 = dma.done [#allocation6], 2048
    $region29: #{tpu_custom_call.1} parent=1 // pred_fallthru
      _
    // Predicated region
    $region30: #{tpu_custom_call.1} parent=1 // pred_check
      _
    $region31: #{tpu_custom_call.1} parent=1 // pred_check_branch
      %71 = sbr.rel (0) target = $region33
    $region32: #{tpu_custom_call.1} parent=1 // pred_region
      %72 = dma.done [#allocation6], 1024
    $region33: #{tpu_custom_call.1} parent=1 // pred_fallthru
      _
    // Predicated region
    $region34: #{tpu_custom_call.1} parent=1 // pred_check
      _
    $region35: #{tpu_custom_call.1} parent=1 // pred_check_branch
      %74 = sbr.rel (0) target = $region37
    $region36: #{tpu_custom_call.1} parent=1 // pred_region
      %75 = dma.done [#allocation9], 1024
    $region37: #{tpu_custom_call.1} parent=1 // pred_fallthru
      _
    %v77 = vld [vmem:[#allocation2] sm:$0xf]
    %v78 = vld [vmem:[#allocation2 + $0x4] sm:$0xf]
    %v79 = vld [vmem:[#allocation2 + $0x8] sm:$0xf]
    %v80 = vld [vmem:[#allocation2 + $0xc] sm:$0xf]
    %v81 = vld [vmem:[#allocation2 + $0x10] sm:$0xf]
    %v82 = vld [vmem:[#allocation2 + $0x14] sm:$0xf]
    %v83 = vld [vmem:[#allocation2 + $0x18] sm:$0xf]
    %v84 = vld [vmem:[#allocation2 + $0x1c] sm:$0xf]
    %v85 = vld [vmem:[#allocation2 + $0x20] sm:$0xf]
    %v86 = vld [vmem:[#allocation2 + $0x24] sm:$0xf]
    %v87 = vld [vmem:[#allocation2 + $0x28] sm:$0xf]
    %v88 = vld [vmem:[#allocation2 + $0x2c] sm:$0xf]
    %v89 = vld [vmem:[#allocation2 + $0x30] sm:$0xf]
    %v90 = vld [vmem:[#allocation2 + $0x34] sm:$0xf]
    %v91 = vld [vmem:[#allocation2 + $0x38] sm:$0xf]
    %v92 = vld [vmem:[#allocation2 + $0x3c] sm:$0xf]
    %v93 = vld [vmem:[#allocation5] sm:$0xff]
    %v94 = vld [vmem:[#allocation5 + $0x8] sm:$0xff]
    %v95 = vld [vmem:[#allocation5 + $0x10] sm:$0xff]
    %v96 = vld [vmem:[#allocation5 + $0x18] sm:$0xff]
    %v97 = vld [vmem:[#allocation5 + $0x20] sm:$0xff]
    %v98 = vld [vmem:[#allocation5 + $0x28] sm:$0xff]
    %v99 = vld [vmem:[#allocation5 + $0x30] sm:$0xff]
    %v100 = vld [vmem:[#allocation5 + $0x38] sm:$0xff]
    %v101 = vld [vmem:[#allocation5 + $0x40] sm:$0xff]
    %v102 = vld [vmem:[#allocation5 + $0x48] sm:$0xff]
    %v103 = vld [vmem:[#allocation5 + $0x50] sm:$0xff]
    %v104 = vld [vmem:[#allocation5 + $0x58] sm:$0xff]
    %v105 = vld [vmem:[#allocation5 + $0x60] sm:$0xff]
    %v106 = vld [vmem:[#allocation5 + $0x68] sm:$0xff]
    %v107 = vld [vmem:[#allocation5 + $0x70] sm:$0xff]
    %v108 = vld [vmem:[#allocation5 + $0x78] sm:$0xff]
    %v125 = vunpack.c.l.b16 %v77
    %v126 = vunpack.c.l.b16 %v78
    %v127 = vunpack.c.l.b16 %v79
    %v128 = vunpack.c.l.b16 %v80
    %v129 = vunpack.c.l.b16 %v81
    %v130 = vunpack.c.l.b16 %v82
    %v131 = vunpack.c.l.b16 %v83
    %v132 = vunpack.c.l.b16 %v84
    %v133 = vunpack.c.l.b16 %v85
    %v134 = vunpack.c.l.b16 %v86
    %v135 = vunpack.c.l.b16 %v87
    %v136 = vunpack.c.l.b16 %v88
    %v137 = vunpack.c.l.b16 %v89
    %v138 = vunpack.c.l.b16 %v90
    %v139 = vunpack.c.l.b16 %v91
    %v140 = vunpack.c.l.b16 %v92
    %v141 = vpack.c.b16 %v126, %v125
    %v142 = vpack.c.b16 %v128, %v127
    %v143 = vpack.c.b16 %v130, %v129
    %v144 = vpack.c.b16 %v132, %v131
    %v145 = vpack.c.b16 %v134, %v133
    %v146 = vpack.c.b16 %v136, %v135
    %v147 = vpack.c.b16 %v138, %v137
    %v148 = vpack.c.b16 %v140, %v139
    %v173 = vunpack.c.l.b16 %v93
    %v174 = vunpack.c.h.b16 %v93
    %v175 = vunpack.c.l.b16 %v94
    %v176 = vunpack.c.h.b16 %v94
    %v177 = vunpack.c.l.b16 %v95
    %v178 = vunpack.c.h.b16 %v95
    %v179 = vunpack.c.l.b16 %v96
    %v180 = vunpack.c.h.b16 %v96
    %v181 = vunpack.c.l.b16 %v97
    %v182 = vunpack.c.h.b16 %v97
    %v183 = vunpack.c.l.b16 %v98
    %v184 = vunpack.c.h.b16 %v98
    %v185 = vunpack.c.l.b16 %v99
    %v186 = vunpack.c.h.b16 %v99
    %v187 = vunpack.c.l.b16 %v100
    %v188 = vunpack.c.h.b16 %v100
    %v189 = vunpack.c.l.b16 %v101
    %v190 = vunpack.c.h.b16 %v101
    %v191 = vunpack.c.l.b16 %v102
    %v192 = vunpack.c.h.b16 %v102
    %v193 = vunpack.c.l.b16 %v103
    %v194 = vunpack.c.h.b16 %v103
    %v195 = vunpack.c.l.b16 %v104
    %v196 = vunpack.c.h.b16 %v104
    %v197 = vunpack.c.l.b16 %v105
    %v198 = vunpack.c.h.b16 %v105
    %v199 = vunpack.c.l.b16 %v106
    %v200 = vunpack.c.h.b16 %v106
    %v201 = vunpack.c.l.b16 %v107
    %v202 = vunpack.c.h.b16 %v107
    %v203 = vunpack.c.l.b16 %v108
    %v204 = vunpack.c.h.b16 %v108
    %v205 = vpack.c.b16 %v175, %v173
    %v206 = vpack.c.b16 %v176, %v174
    %v207 = vpack.c.b16 %v179, %v177
    %v208 = vpack.c.b16 %v180, %v178
    %v209 = vpack.c.b16 %v183, %v181
    %v210 = vpack.c.b16 %v184, %v182
    %v211 = vpack.c.b16 %v187, %v185
    %v212 = vpack.c.b16 %v188, %v186
    %v213 = vpack.c.b16 %v191, %v189
    %v214 = vpack.c.b16 %v192, %v190
    %v215 = vpack.c.b16 %v195, %v193
    %v216 = vpack.c.b16 %v196, %v194
    %v217 = vpack.c.b16 %v199, %v197
    %v218 = vpack.c.b16 %v200, %v198
    %v219 = vpack.c.b16 %v203, %v201
    %v220 = vpack.c.b16 %v204, %v202
    %237 = vmatprep.subr.bf16.mxu0 %v206
    %238 = vmatpush1.bf16.msra.mxu0 %v205
    %239 = vmatprep.subr.bf16.mxu0 %v208
    %240 = vmatpush1.bf16.msra.mxu0 %v207
    %241 = vmatprep.subr.bf16.mxu0 %v210
    %242 = vmatpush1.bf16.msra.mxu0 %v209
    %243 = vmatprep.subr.bf16.mxu0 %v212
    %244 = vmatpush1.bf16.msra.mxu0 %v211
    %245 = vmatprep.subr.bf16.mxu0 %v214
    %246 = vmatpush1.bf16.msra.mxu0 %v213
    %247 = vmatprep.subr.bf16.mxu0 %v216
    %248 = vmatpush1.bf16.msra.mxu0 %v215
    %249 = vmatprep.subr.bf16.mxu0 %v218
    %250 = vmatpush1.bf16.msra.mxu0 %v217
    %251 = vmatprep.subr.bf16.mxu0 %v220
    %252 = vmatpush1.bf16.msra.mxu0 %v219
    %253 = vmatprep.subr.bf16.mxu0 0
    %254 = vmatpush1.bf16.msra.mxu0 0
    %255 = vmatprep.subr.bf16.mxu0 0
    %256 = vmatpush1.bf16.msra.mxu0 0
    %257 = vmatprep.subr.bf16.mxu0 0
    %258 = vmatpush1.bf16.msra.mxu0 0
    %259 = vmatprep.subr.bf16.mxu0 0
    %260 = vmatpush1.bf16.msra.mxu0 0
    %261 = vmatprep.subr.bf16.mxu0 0
    %262 = vmatpush1.bf16.msra.mxu0 0
    %263 = vmatprep.subr.bf16.mxu0 0
    %264 = vmatpush1.bf16.msra.mxu0 0
    %265 = vmatprep.subr.bf16.mxu0 0
    %266 = vmatpush1.bf16.msra.mxu0 0
    %267 = vmatprep.subr.bf16.mxu0 0
    %268 = vmatpush1.bf16.msra.mxu0 0
    %269 = vmatprep.mubr.bf16.mxu0 0
    %270 = vmatmul.mubr.bf16.gmra.mrb[0].mxu0 %v141
    %v271 = vpop.f32.mrb[0].mxu0
    %v272 = vadd.f32 0.0, %v271
    %v273 = vpop.f32.mrb[0].mxu0
    %v274 = vadd.f32 0.0, %v273
    %v275 = vpop.f32.mrb[0].mxu0
    %v276 = vadd.f32 0.0, %v275
    %v277 = vpop.f32.mrb[0].mxu0
    %v278 = vadd.f32 0.0, %v277
    %279 = vmatprep.mubr.bf16.mxu0 0
    %280 = vmatmul.mubr.bf16.gmra.mrb[0].mxu0 %v142
    %v281 = vpop.f32.mrb[0].mxu0
    %v282 = vadd.f32 0.0, %v281
    %v283 = vpop.f32.mrb[0].mxu0
    %v284 = vadd.f32 0.0, %v283
    %v285 = vpop.f32.mrb[0].mxu0
    %v286 = vadd.f32 0.0, %v285
    %v287 = vpop.f32.mrb[0].mxu0
    %v288 = vadd.f32 0.0, %v287
    %289 = vmatprep.mubr.bf16.mxu0 0
    %290 = vmatmul.mubr.bf16.gmra.mrb[0].mxu0 %v143
    %v291 = vpop.f32.mrb[0].mxu0
    %v292 = vadd.f32 0.0, %v291
    %v293 = vpop.f32.mrb[0].mxu0
    %v294 = vadd.f32 0.0, %v293
    %v295 = vpop.f32.mrb[0].mxu0
    %v296 = vadd.f32 0.0, %v295
    %v297 = vpop.f32.mrb[0].mxu0
    %v298 = vadd.f32 0.0, %v297
    %299 = vmatprep.mubr.bf16.mxu0 0
    %300 = vmatmul.mubr.bf16.gmra.mrb[0].mxu0 %v144
    %v301 = vpop.f32.mrb[0].mxu0
    %v302 = vadd.f32 0.0, %v301
    %v303 = vpop.f32.mrb[0].mxu0
    %v304 = vadd.f32 0.0, %v303
    %v305 = vpop.f32.mrb[0].mxu0
    %v306 = vadd.f32 0.0, %v305
    %v307 = vpop.f32.mrb[0].mxu0
    %v308 = vadd.f32 0.0, %v307
    %309 = vmatprep.mubr.bf16.mxu0 0
    %310 = vmatmul.mubr.bf16.gmra.mrb[0].mxu0 %v145
    %v311 = vpop.f32.mrb[0].mxu0
    %v312 = vadd.f32 0.0, %v311
    %v313 = vpop.f32.mrb[0].mxu0
    %v314 = vadd.f32 0.0, %v313
    %v315 = vpop.f32.mrb[0].mxu0
    %v316 = vadd.f32 0.0, %v315
    %v317 = vpop.f32.mrb[0].mxu0
    %v318 = vadd.f32 0.0, %v317
    %319 = vmatprep.mubr.bf16.mxu0 0
    %320 = vmatmul.mubr.bf16.gmra.mrb[0].mxu0 %v146
    %v321 = vpop.f32.mrb[0].mxu0
    %v322 = vadd.f32 0.0, %v321
    %v323 = vpop.f32.mrb[0].mxu0
    %v324 = vadd.f32 0.0, %v323
    %v325 = vpop.f32.mrb[0].mxu0
    %v326 = vadd.f32 0.0, %v325
    %v327 = vpop.f32.mrb[0].mxu0
    %v328 = vadd.f32 0.0, %v327
    %329 = vmatprep.mubr.bf16.mxu0 0
    %330 = vmatmul.mubr.bf16.gmra.mrb[0].mxu0 %v147
    %v331 = vpop.f32.mrb[0].mxu0
    %v332 = vadd.f32 0.0, %v331
    %v333 = vpop.f32.mrb[0].mxu0
    %v334 = vadd.f32 0.0, %v333
    %v335 = vpop.f32.mrb[0].mxu0
    %v336 = vadd.f32 0.0, %v335
    %v337 = vpop.f32.mrb[0].mxu0
    %v338 = vadd.f32 0.0, %v337
    %339 = vmatprep.mubr.bf16.mxu0 0
    %340 = vmatmul.mubr.bf16.gmra.mrb[0].mxu0 %v148
    %v341 = vpop.f32.mrb[0].mxu0
    %v342 = vadd.f32 0.0, %v341
    %v343 = vpop.f32.mrb[0].mxu0
    %v344 = vadd.f32 0.0, %v343
    %v345 = vpop.f32.mrb[0].mxu0
    %v346 = vadd.f32 0.0, %v345
    %v347 = vpop.f32.mrb[0].mxu0
    %v348 = vadd.f32 0.0, %v347
    %349 = vdwg.mxu0
    %v350 = vmax.f32 %v272, 0.0
    %v351 = vmax.f32 %v276, 0.0
    %v352 = vmax.f32 %v282, 0.0
    %v353 = vmax.f32 %v286, 0.0
    %v354 = vmax.f32 %v292, 0.0
    %v355 = vmax.f32 %v296, 0.0
    %v356 = vmax.f32 %v302, 0.0
    %v357 = vmax.f32 %v306, 0.0
    %v358 = vmax.f32 %v312, 0.0
    %v359 = vmax.f32 %v316, 0.0
    %v360 = vmax.f32 %v322, 0.0
    %v361 = vmax.f32 %v326, 0.0
    %v362 = vmax.f32 %v332, 0.0
    %v363 = vmax.f32 %v336, 0.0
    %v364 = vmax.f32 %v342, 0.0
    %v365 = vmax.f32 %v346, 0.0
    %v366 = vld [vmem:[%s2] sm:$0x3]
    %v369 = vunpack.c.l.s4 1966171168
    %v370 = vunpack.c.0.s8 %v369
    %v371 = vlaneseq
    %v372 = vshrl.u32 %v371, 7
    %v373 = vsub.s32 %v370, %v372
    %v374 = vrot.slane %v366, %v373
    %v375 = vcombine.high %v374, %v374
    %v377 = vunpack.c.l.s4 1966171168
    %v378 = vunpack.c.0.s8 %v377
    %v379 = vlaneseq
    %v380 = vshrl.u32 %v379, 7
    %v381 = vsub.s32 %v378, %v380
    %v382 = vrot.slane %v374, %v381
    %v384 = vunpack.c.l.s4 1966171168
    %v385 = vunpack.c.0.s8 %v384
    %v386 = vlaneseq
    %v387 = vshrl.u32 %v386, 7
    %v388 = vsub.s32 %v385, %v387
    %v389 = vrot.slane %v375, %v388
    %v390 = vlaneseq
    %v391 = vshrl.u32 %v390, 7
    %v392 = vsub.s32 0, %v391
    %v393 = vrot.slane %v382, %v392
    %v394 = vlaneseq
    %v395 = vshrl.u32 %v394, 7
    %v396 = vsub.s32 0, %v395
    %v397 = vrot.slane %v389, %v396
    %v400 = vmul.f32 %v350, %v393
    %v401 = vmul.f32 %v351, %v393
    %v402 = vmul.f32 %v352, %v393
    %v403 = vmul.f32 %v353, %v393
    %v404 = vmul.f32 %v354, %v393
    %v405 = vmul.f32 %v355, %v393
    %v406 = vmul.f32 %v356, %v393
    %v407 = vmul.f32 %v357, %v393
    %v408 = vmul.f32 %v358, %v397
    %v409 = vmul.f32 %v359, %v397
    %v410 = vmul.f32 %v360, %v397
    %v411 = vmul.f32 %v361, %v397
    %v412 = vmul.f32 %v362, %v397
    %v413 = vmul.f32 %v363, %v397
    %v414 = vmul.f32 %v364, %v397
    %v415 = vmul.f32 %v365, %v397
    %v416 = vadd.f32 %v274, %v400
    %v417 = vadd.f32 %v278, %v401
    %v418 = vadd.f32 %v284, %v402
    %v419 = vadd.f32 %v288, %v403
    %v420 = vadd.f32 %v294, %v404
    %v421 = vadd.f32 %v298, %v405
    %v422 = vadd.f32 %v304, %v406
    %v423 = vadd.f32 %v308, %v407
    %v424 = vadd.f32 %v314, %v408
    %v425 = vadd.f32 %v318, %v409
    %v426 = vadd.f32 %v324, %v410
    %v427 = vadd.f32 %v328, %v411
    %v428 = vadd.f32 %v334, %v412
    %v429 = vadd.f32 %v338, %v413
    %v430 = vadd.f32 %v344, %v414
    %v431 = vadd.f32 %v348, %v415
    %432 = vadd.xlane.f32.xlu0 %v416
    %v433 = vpop.xlane.xlu0 %432
    %434 = vadd.xlane.f32.xlu0 %v417
    %v435 = vpop.xlane.xlu0 %434
    %436 = vadd.xlane.f32.xlu0 %v418
    %v437 = vpop.xlane.xlu0 %436
    %438 = vadd.xlane.f32.xlu0 %v419
    %v439 = vpop.xlane.xlu0 %438
    %440 = vadd.xlane.f32.xlu0 %v420
    %v441 = vpop.xlane.xlu0 %440
    %442 = vadd.xlane.f32.xlu0 %v421
    %v443 = vpop.xlane.xlu0 %442
    %444 = vadd.xlane.f32.xlu0 %v422
    %v445 = vpop.xlane.xlu0 %444
    %446 = vadd.xlane.f32.xlu0 %v423
    %v447 = vpop.xlane.xlu0 %446
    %448 = vadd.xlane.f32.xlu0 %v424
    %v449 = vpop.xlane.xlu0 %448
    %450 = vadd.xlane.f32.xlu0 %v425
    %v451 = vpop.xlane.xlu0 %450
    %452 = vadd.xlane.f32.xlu0 %v426
    %v453 = vpop.xlane.xlu0 %452
    %454 = vadd.xlane.f32.xlu0 %v427
    %v455 = vpop.xlane.xlu0 %454
    %456 = vadd.xlane.f32.xlu0 %v428
    %v457 = vpop.xlane.xlu0 %456
    %458 = vadd.xlane.f32.xlu0 %v429
    %v459 = vpop.xlane.xlu0 %458
    %460 = vadd.xlane.f32.xlu0 %v430
    %v461 = vpop.xlane.xlu0 %460
    %462 = vadd.xlane.f32.xlu0 %v431
    %v463 = vpop.xlane.xlu0 %462
    %v464 = vadd.f32 %v433, %v435
    %v465 = vadd.f32 %v464, %v437
    %v466 = vadd.f32 %v465, %v439
    %v467 = vadd.f32 %v466, %v441
    %v468 = vadd.f32 %v467, %v443
    %v469 = vadd.f32 %v468, %v445
    %v470 = vadd.f32 %v469, %v447
    %v471 = vrot.slane %v470, 4
    %v472 = vadd.f32 %v470, %v471
    %v473 = vrot.slane %v472, 2
    %v474 = vadd.f32 %v472, %v473
    %v475 = vrot.slane %v474, 1
    %v476 = vadd.f32 %v474, %v475
    %v477 = vadd.f32 %v449, %v451
    %v478 = vadd.f32 %v477, %v453
    %v479 = vadd.f32 %v478, %v455
    %v480 = vadd.f32 %v479, %v457
    %v481 = vadd.f32 %v480, %v459
    %v482 = vadd.f32 %v481, %v461
    %v483 = vadd.f32 %v482, %v463
    %v484 = vrot.slane %v483, 4
    %v485 = vadd.f32 %v483, %v484
    %v486 = vrot.slane %v485, 2
    %v487 = vadd.f32 %v485, %v486
    %v488 = vrot.slane %v487, 1
    %v489 = vadd.f32 %v487, %v488
    %v490 = vmul.f32 %v416, %v416
    %v491 = vmul.f32 %v417, %v417
    %v492 = vmul.f32 %v418, %v418
    %v493 = vmul.f32 %v419, %v419
    %v494 = vmul.f32 %v420, %v420
    %v495 = vmul.f32 %v421, %v421
    %v496 = vmul.f32 %v422, %v422
    %v497 = vmul.f32 %v423, %v423
    %v498 = vmul.f32 %v424, %v424
    %v499 = vmul.f32 %v425, %v425
    %v500 = vmul.f32 %v426, %v426
    %v501 = vmul.f32 %v427, %v427
    %v502 = vmul.f32 %v428, %v428
    %v503 = vmul.f32 %v429, %v429
    %v504 = vmul.f32 %v430, %v430
    %v505 = vmul.f32 %v431, %v431
    %506 = vadd.xlane.f32.xlu0 %v490
    %v507 = vpop.xlane.xlu0 %506
    %508 = vadd.xlane.f32.xlu0 %v491
    %v509 = vpop.xlane.xlu0 %508
    %510 = vadd.xlane.f32.xlu0 %v492
    %v511 = vpop.xlane.xlu0 %510
    %512 = vadd.xlane.f32.xlu0 %v493
    %v513 = vpop.xlane.xlu0 %512
    %514 = vadd.xlane.f32.xlu0 %v494
    %v515 = vpop.xlane.xlu0 %514
    %516 = vadd.xlane.f32.xlu0 %v495
    %v517 = vpop.xlane.xlu0 %516
    %518 = vadd.xlane.f32.xlu0 %v496
    %v519 = vpop.xlane.xlu0 %518
    %520 = vadd.xlane.f32.xlu0 %v497
    %v521 = vpop.xlane.xlu0 %520
    %522 = vadd.xlane.f32.xlu0 %v498
    %v523 = vpop.xlane.xlu0 %522
    %524 = vadd.xlane.f32.xlu0 %v499
    %v525 = vpop.xlane.xlu0 %524
    %526 = vadd.xlane.f32.xlu0 %v500
    %v527 = vpop.xlane.xlu0 %526
    %528 = vadd.xlane.f32.xlu0 %v501
    %v529 = vpop.xlane.xlu0 %528
    %530 = vadd.xlane.f32.xlu0 %v502
    %v531 = vpop.xlane.xlu0 %530
    %532 = vadd.xlane.f32.xlu0 %v503
    %v533 = vpop.xlane.xlu0 %532
    %534 = vadd.xlane.f32.xlu0 %v504
    %v535 = vpop.xlane.xlu0 %534
    %536 = vadd.xlane.f32.xlu0 %v505
    %v537 = vpop.xlane.xlu0 %536
    %v538 = vadd.f32 %v507, %v509
    %v539 = vadd.f32 %v538, %v511
    %v540 = vadd.f32 %v539, %v513
    %v541 = vadd.f32 %v540, %v515
    %v542 = vadd.f32 %v541, %v517
    %v543 = vadd.f32 %v542, %v519
    %v544 = vadd.f32 %v543, %v521
    %v545 = vrot.slane %v544, 4
    %v546 = vadd.f32 %v544, %v545
    %v547 = vrot.slane %v546, 2
    %v548 = vadd.f32 %v546, %v547
    %v549 = vrot.slane %v548, 1
    %v550 = vadd.f32 %v548, %v549
    %v551 = vadd.f32 %v523, %v525
    %v552 = vadd.f32 %v551, %v527
    %v553 = vadd.f32 %v552, %v529
    %v554 = vadd.f32 %v553, %v531
    %v555 = vadd.f32 %v554, %v533
    %v556 = vadd.f32 %v555, %v535
    %v557 = vadd.f32 %v556, %v537
    %v558 = vrot.slane %v557, 4
    %v559 = vadd.f32 %v557, %v558
    %v560 = vrot.slane %v559, 2
    %v561 = vadd.f32 %v559, %v560
    %v562 = vrot.slane %v561, 1
    %v563 = vadd.f32 %v561, %v562
    %v564 = vmul.f32 %v476, 0.00012207031
    %v565 = vmul.f32 %v489, 0.00012207031
    %v566 = vmul.f32 %v550, 0.00012207031
    %v567 = vmul.f32 %v563, 0.00012207031
    %v568 = vmul.f32 %v564, %v564
    %v569 = vmul.f32 %v565, %v565
    %v570 = vsub.f32 %v566, %v568
    %v571 = vsub.f32 %v567, %v569
    %v572 = vadd.f32 %v570, 1e-05
    %v573 = vadd.f32 %v571, 1e-05
    %v574 = vrsqrt.pop %v572
    %v575 = vrsqrt.pop %v573
    %v576 = vsub.f32 %v416, %v564
    %v577 = vsub.f32 %v417, %v564
    %v578 = vsub.f32 %v418, %v564
    %v579 = vsub.f32 %v419, %v564
    %v580 = vsub.f32 %v420, %v564
    %v581 = vsub.f32 %v421, %v564
    %v582 = vsub.f32 %v422, %v564
    %v583 = vsub.f32 %v423, %v564
    %v584 = vsub.f32 %v424, %v565
    %v585 = vsub.f32 %v425, %v565
    %v586 = vsub.f32 %v426, %v565
    %v587 = vsub.f32 %v427, %v565
    %v588 = vsub.f32 %v428, %v565
    %v589 = vsub.f32 %v429, %v565
    %v590 = vsub.f32 %v430, %v565
    %v591 = vsub.f32 %v431, %v565
    %v592 = vmul.f32 %v576, %v574
    %v593 = vmul.f32 %v577, %v574
    %v594 = vmul.f32 %v578, %v574
    %v595 = vmul.f32 %v579, %v574
    %v596 = vmul.f32 %v580, %v574
    %v597 = vmul.f32 %v581, %v574
    %v598 = vmul.f32 %v582, %v574
    %v599 = vmul.f32 %v583, %v574
    %v600 = vmul.f32 %v584, %v575
    %v601 = vmul.f32 %v585, %v575
    %v602 = vmul.f32 %v586, %v575
    %v603 = vmul.f32 %v587, %v575
    %v604 = vmul.f32 %v588, %v575
    %v605 = vmul.f32 %v589, %v575
    %v606 = vmul.f32 %v590, %v575
    %v607 = vmul.f32 %v591, %v575
    %v608 = vld [vmem:[#allocation7] sm:$0xff]
    %v609 = vld [vmem:[#allocation7 + $0x8] sm:$0xff]
    %v610 = vld [vmem:[#allocation7 + $0x10] sm:$0xff]
    %v611 = vld [vmem:[#allocation7 + $0x18] sm:$0xff]
    %v612 = vld [vmem:[#allocation7 + $0x20] sm:$0xff]
    %v613 = vld [vmem:[#allocation7 + $0x28] sm:$0xff]
    %v614 = vld [vmem:[#allocation7 + $0x30] sm:$0xff]
    %v615 = vld [vmem:[#allocation7 + $0x38] sm:$0xff]
    %v616 = vmul.f32 %v592, %v608
    %v617 = vmul.f32 %v593, %v609
    %v618 = vmul.f32 %v594, %v610
    %v619 = vmul.f32 %v595, %v611
    %v620 = vmul.f32 %v596, %v612
    %v621 = vmul.f32 %v597, %v613
    %v622 = vmul.f32 %v598, %v614
    %v623 = vmul.f32 %v599, %v615
    %v624 = vmul.f32 %v600, %v608
    %v625 = vmul.f32 %v601, %v609
    %v626 = vmul.f32 %v602, %v610
    %v627 = vmul.f32 %v603, %v611
    %v628 = vmul.f32 %v604, %v612
    %v629 = vmul.f32 %v605, %v613
    %v630 = vmul.f32 %v606, %v614
    %v631 = vmul.f32 %v607, %v615
    %v632 = vld [vmem:[#allocation8] sm:$0xff]
    %v633 = vld [vmem:[#allocation8 + $0x8] sm:$0xff]
    %v634 = vld [vmem:[#allocation8 + $0x10] sm:$0xff]
    %v635 = vld [vmem:[#allocation8 + $0x18] sm:$0xff]
    %v636 = vld [vmem:[#allocation8 + $0x20] sm:$0xff]
    %v637 = vld [vmem:[#allocation8 + $0x28] sm:$0xff]
    %v638 = vld [vmem:[#allocation8 + $0x30] sm:$0xff]
    %v639 = vld [vmem:[#allocation8 + $0x38] sm:$0xff]
    %v640 = vadd.f32 %v616, %v632
    %v641 = vadd.f32 %v617, %v633
    %v642 = vadd.f32 %v618, %v634
    %v643 = vadd.f32 %v619, %v635
    %v644 = vadd.f32 %v620, %v636
    %v645 = vadd.f32 %v621, %v637
    %v646 = vadd.f32 %v622, %v638
    %v647 = vadd.f32 %v623, %v639
    %v648 = vadd.f32 %v624, %v632
    %v649 = vadd.f32 %v625, %v633
    %v650 = vadd.f32 %v626, %v634
    %v651 = vadd.f32 %v627, %v635
    %v652 = vadd.f32 %v628, %v636
    %v653 = vadd.f32 %v629, %v637
    %v654 = vadd.f32 %v630, %v638
    %v655 = vadd.f32 %v631, %v639
    %v656 = vmax.f32 %v640, 0.0
    %v657 = vmax.f32 %v641, 0.0
    %v658 = vmax.f32 %v642, 0.0
    %v659 = vmax.f32 %v643, 0.0
    %v660 = vmax.f32 %v644, 0.0
    %v661 = vmax.f32 %v645, 0.0
    %v662 = vmax.f32 %v646, 0.0
    %v663 = vmax.f32 %v647, 0.0
    %v664 = vmax.f32 %v648, 0.0
    %v665 = vmax.f32 %v649, 0.0
    %v666 = vmax.f32 %v650, 0.0
    %v667 = vmax.f32 %v651, 0.0
    %v668 = vmax.f32 %v652, 0.0
    %v669 = vmax.f32 %v653, 0.0
    %v670 = vmax.f32 %v654, 0.0
    %v671 = vmax.f32 %v655, 0.0
    %672 = vst [vmem:[#allocation10] sm:$0xff] %v656
    %673 = vst [vmem:[#allocation10 + $0x8] sm:$0xff] %v657
    %674 = vst [vmem:[#allocation10 + $0x10] sm:$0xff] %v658
    %675 = vst [vmem:[#allocation10 + $0x18] sm:$0xff] %v659
    %676 = vst [vmem:[#allocation10 + $0x20] sm:$0xff] %v660
    %677 = vst [vmem:[#allocation10 + $0x28] sm:$0xff] %v661
    %678 = vst [vmem:[#allocation10 + $0x30] sm:$0xff] %v662
    %679 = vst [vmem:[#allocation10 + $0x38] sm:$0xff] %v663
    %680 = vst [vmem:[#allocation10 + $0x40] sm:$0xff] %v664
    %681 = vst [vmem:[#allocation10 + $0x48] sm:$0xff] %v665
    %682 = vst [vmem:[#allocation10 + $0x50] sm:$0xff] %v666
    %683 = vst [vmem:[#allocation10 + $0x58] sm:$0xff] %v667
    %684 = vst [vmem:[#allocation10 + $0x60] sm:$0xff] %v668
    %685 = vst [vmem:[#allocation10 + $0x68] sm:$0xff] %v669
    %686 = vst [vmem:[#allocation10 + $0x70] sm:$0xff] %v670
    %687 = vst [vmem:[#allocation10 + $0x78] sm:$0xff] %v671
    // Predicated region
    $region38: #{tpu_custom_call.1} parent=1 // pred_check
      _
    $region39: #{tpu_custom_call.1} parent=1 // pred_check_branch
      %689 = sbr.rel (0) target = $region41
    $region40: #{tpu_custom_call.1} parent=1 // pred_region
      %s691 = ssub.s32 2048, 2048
      %692 = vsyncadd [#allocation4], %s691
      %s693 = sshll.u32 [#allocation10], 4
      %s694 = int_to_ptr.vmem [resolvable:$true] %s693
      %699 = dma.vmem_to_hbm [thread:$0]  %s694, 2048, %s5, [#allocation4], 128, 128, 8
    $region41: #{tpu_custom_call.1} parent=1 // pred_fallthru
      _
    // Predicated region
    $region42: #{tpu_custom_call.1} parent=1 // pred_check
      _
    $region43: #{tpu_custom_call.1} parent=1 // pred_check_branch
      %701 = sbr.rel (0) target = $region45
    $region44: #{tpu_custom_call.1} parent=1 // pred_region
      %702 = dma.done [#allocation4], 2048
    $region45: #{tpu_custom_call.1} parent=1 // pred_fallthru
      _
    %703 = vsyncpa [#allocation3], 1
    %704 = vsyncpa [#allocation6], 1
    %705 = vsyncpa [#allocation9], 1
    %706 = vsyncpa [#allocation4], 1

</llo_original>
